<compile_context>
chip_gen: v7x
topology: tpu7x:2x2x1
jax: 0.10.0
libtpu: 0.0.40
codegen_flags: <defaults>
</compile_context>

<pallas_src>
import math

import jax
import jax.numpy as jnp
import numpy as np
from jax import lax
from jax.experimental import pallas as pl
from jax.experimental.pallas import tpu as pltpu

# ----- config (small synthetic __C) -----------------------------------------
HIDDEN_SIZE = 32          # __C.HIDDEN_SIZE
DG = 16                   # __C.DG
MULTI_HEAD = 4            # __C.MULTI_HEAD
HIDDEN_SIZE_HEAD = 8      # __C.HIDDEN_SIZE_HEAD  (HIDDEN_SIZE // MULTI_HEAD)
DROPOUT_R = 0.1           # __C.DROPOUT_R
BATCH = 2
SEQ = 8

_SCALE = 1.0 / math.sqrt(HIDDEN_SIZE_HEAD)
_NEG = -1e9        # torch masked_fill value (exact semantics preserved)
_CROSS = -1e30     # cross-(head,batch) block bias; exp() underflows to exactly 0
_LANE = 128        # TPU lane width


# ----- Pallas kernel ----------------------------------------------------------
def _make_kernel(b, s, h, mh, dh, dg):
    bs = b * s          # token rows
    n = mh * bs         # head-replicated rows, ordered (head, batch, seq)
    pieces = _LANE // h           # row groups folded into lanes for the store
    rpp = bs // pieces            # rows per lane piece
    assert _LANE % h == 0 and bs % pieces == 0

    def kernel(x_ref, pad_ref, bias_ref, hmask_ref,
               w_vkq_ref, b_vkq_ref, w_gqk_ref, b_gqk_ref, wg_ref, bg_ref,
               out_ref):
        # ---- fused V/K/Q projections: one MXU push ---------------------------
        # rows = [v; k; q] (stacked in the wrapper), cols = [Wv | Wk | Wq];
        # the diagonal (bs, h) blocks are the three projections.
        y1 = jnp.dot(x_ref[...], w_vkq_ref[...],
                     preferred_element_type=jnp.float32) + b_vkq_ref[...]
        vp = y1[0 * bs:1 * bs, 0 * h:1 * h]
        kp = y1[1 * bs:2 * bs, 1 * h:2 * h]
        qp = y1[2 * bs:3 * bs, 2 * h:3 * h]

        # ---- fused gating projections: one MXU push --------------------------
        x2 = jnp.concatenate([qp, kp], axis=0)                          # (2bs, h)
        y2 = jnp.dot(x2, w_gqk_ref[...],
                     preferred_element_type=jnp.float32) + b_gqk_ref[...]
        gq = y2[0 * bs:1 * bs, 0 * dg:1 * dg]
        gk = y2[1 * bs:2 * bs, 1 * dg:2 * dg]

        gate = jax.nn.sigmoid(
            jnp.dot(gq * gk, wg_ref[...],
                    preferred_element_type=jnp.float32) + bg_ref[...])  # (bs, 2)
        k_m = gate[:, 0:1] * kp
        q_m = (gate[:, 1:2] * _SCALE) * qp   # fold 1/sqrt(dh) into the query gate

        # ---- head separation without any lane slicing ------------------------
        # Replicate the (bs, h) matrices per head along rows (sublane concat,
        # no relayout) and zero non-owned columns of Q/V with a STATIC mask.
        # Zeroed columns contribute exact 0 to the contractions, so the
        # (n, h)-wide matmuls equal the per-head (.., dh) contractions.
        hmask = hmask_ref[...]                                          # (n, h)
        q_exp = jnp.concatenate([q_m] * mh, axis=0) * hmask             # (n, h)
        k_rep = jnp.concatenate([k_m] * mh, axis=0)                     # (n, h)
        v_exp = jnp.concatenate([vp] * mh, axis=0) * hmask              # (n, h)

        # ---- attention: 2 MXU pushes + 1 softmax for all heads ----------------
        scores = lax.dot_general(q_exp, k_rep, (((1,), (1,)), ((), ())),
                                 preferred_element_type=jnp.float32)    # (n, n)

        # key-padding mask (replace -> exact torch masked_fill semantics), then
        # the precomputed cross-(head,batch) bias.  _CROSS << _NEG so a fully
        # key-padded block still reduces to uniform attention, matching the
        # reference per-head softmax.
        scores = jnp.where(pad_ref[...] > 0.0, _NEG, scores) + bias_ref[...]

        m = jnp.max(scores, axis=-1, keepdims=True)
        e = jnp.exp(scores - m)
        attn = e / jnp.sum(e, axis=-1, keepdims=True)   # exact divide, (n,1) denom
        # TODO(synk): dropout_attention_map omitted (inference/eval -> identity)

        o_wide = jnp.dot(attn, v_exp, preferred_element_type=jnp.float32)  # (n, h)

        # Per-head blocks occupy disjoint columns -> summing the mh row blocks
        # recovers the (bs, h) output in PyTorch column order (head, d).
        o2 = o_wide[0:bs, :]
        for i in range(1, mh):
            o2 = o2 + o_wide[i * bs:(i + 1) * bs, :]

        # ---- lane-dense store: fold row groups into lanes -> (rpp, 128) -------
        out_ref[...] = jnp.concatenate(
            [o2[u * rpp:(u + 1) * rpp, :] for u in range(pieces)], axis=1)

    return kernel


# ----- wrapper ----------------------------------------------------------------
def _fuse_params(p):
    w_vkq = jnp.concatenate([p["wv"], p["wk"], p["wq"]], axis=1)    # (H, 3H)
    b_vkq = jnp.concatenate([p["bv"], p["bk"], p["bq"]], axis=1)    # (1, 3H)
    w_gqk = jnp.concatenate([p["wgq"], p["wgk"]], axis=1)           # (H, 2DG)
    b_gqk = jnp.concatenate([p["bgq"], p["bgk"]], axis=1)           # (1, 2DG)
    return w_vkq, b_vkq, w_gqk, b_gqk, p["wg"], p["bg"]


def gated_sa(v, k, q, mask_bool, params):
    """mask_bool: (B, S) key-padding mask, True = masked (torch semantics)."""
    B, S, H = q.shape
    MH, DH = MULTI_HEAD, HIDDEN_SIZE_HEAD
    bs = B * S
    n = MH * bs
    pieces = _LANE // H
    rpp = bs // pieces

    # Row-stacked [v; k; q] for the single fused projection matmul.
    x_in = jnp.concatenate(
        [v.reshape(bs, H), k.reshape(bs, H), q.reshape(bs, H)], axis=0)  # (3bs, H)

    # Packed key-padding row (head-major replicated keys): col = head*bs + b*S + t.
    pad_row = jnp.tile(mask_bool.reshape(bs).astype(jnp.float32), MH).reshape(1, n)

    # Static (n, n) bias: 0 where query & key share (head, batch), -1e30 elsewhere.
    idx = np.arange(n)
    head = idx // bs
    batch = (idx % bs) // S
    valid = (head[:, None] == head[None, :]) & (batch[:, None] == batch[None, :])
    bias = jnp.asarray(np.where(valid, 0.0, _CROSS), dtype=jnp.float32)

    # Static (n, H) head mask: row r keeps only head(r)'s DH columns.
    hmask = jnp.asarray(
        (head[:, None] == (np.arange(H) // DH)[None, :]).astype(np.float32))

    w_vkq, b_vkq, w_gqk, b_gqk, wg, bg = _fuse_params(params)
    kernel = _make_kernel(B, S, H, MH, DH, DG)

    def full_spec(shape):
        nd = len(shape)
        return pl.BlockSpec(shape, lambda g, _nd=nd: (0,) * _nd)

    operands = (x_in, pad_row, bias, hmask, w_vkq, b_vkq, w_gqk, b_gqk, wg, bg)

    out_w = pl.pallas_call(
        kernel,
        out_shape=jax.ShapeDtypeStruct((rpp, pieces * H), jnp.float32),
        grid_spec=pltpu.PrefetchScalarGridSpec(
            num_scalar_prefetch=0,
            grid=(1,),                      # single fused step (review: no v7x split)
            in_specs=[full_spec(x.shape) for x in operands],
            out_specs=full_spec((rpp, pieces * H)),
        ),
        compiler_params=pltpu.CompilerParams(dimension_semantics=("arbitrary",)),
    )(*operands)

    # Undo the lane-dense folding in XLA (free): out_w[g, u*H + c] = o2[u*rpp+g, c].
    o2 = out_w.reshape(rpp, pieces, H).transpose(1, 0, 2).reshape(bs, H)
    return o2.reshape(B, S, H)


# ----- pure-JAX reference (mirrors the PyTorch forward) -----------------------
def gated_sa_ref(v, k, q, mask_bool, p):
    vp = v @ p["wv"] + p["bv"]
    kp = k @ p["wk"] + p["bk"]
    qp = q @ p["wq"] + p["bq"]
    gate = jax.nn.sigmoid(
        ((qp @ p["wgq"] + p["bgq"]) * (kp @ p["wgk"] + p["bgk"])) @ p["wg"] + p["bg"])
    k_m = gate[:, :, 0:1] * kp
    q_m = gate[:, :, 1:2] * qp

    def split_heads(x):
        B, S, H = x.shape
        return x.reshape(B, S, MULTI_HEAD, HIDDEN_SIZE_HEAD).transpose(0, 2, 1, 3)

    vh, kh, qh = split_heads(vp), split_heads(k_m), split_heads(q_m)
    scores = jnp.einsum("bhqd,bhkd->bhqk", qh, kh) * _SCALE
    scores = jnp.where(mask_bool[:, None, None, :], _NEG, scores)
    attn = jax.nn.softmax(scores, axis=-1)
    out = jnp.einsum("bhqk,bhkd->bhqd", attn, vh)
    return out.transpose(0, 2, 1, 3).reshape(v.shape[0], v.shape[1], HIDDEN_SIZE)


# ----- deterministic parameter init -------------------------------------------
def make_params(key):
    keys = jax.random.split(key, 12)

    def lin(kw, kb, fan_in, fan_out):
        bound = 1.0 / math.sqrt(fan_in)
        w = jax.random.uniform(kw, (fan_in, fan_out), jnp.float32, -bound, bound)
        b = jax.random.uniform(kb, (1, fan_out), jnp.float32, -bound, bound)
        return w, b

    p = {}
    p["wv"], p["bv"] = lin(keys[0], keys[1], HIDDEN_SIZE, HIDDEN_SIZE)
    p["wk"], p["bk"] = lin(keys[2], keys[3], HIDDEN_SIZE, HIDDEN_SIZE)
    p["wq"], p["bq"] = lin(keys[4], keys[5], HIDDEN_SIZE, HIDDEN_SIZE)
    p["wgk"], p["bgk"] = lin(keys[6], keys[7], HIDDEN_SIZE, DG)
    p["wgq"], p["bgq"] = lin(keys[8], keys[9], HIDDEN_SIZE, DG)
    p["wg"], p["bg"] = lin(keys[10], keys[11], DG, 2)
    return p


if __name__ == "__main__":
    root = jax.random.PRNGKey(0)
    kv, kk, kq, kp = jax.random.split(root, 4)

    v = jax.random.normal(kv, (BATCH, SEQ, HIDDEN_SIZE), jnp.float32)
    k = jax.random.normal(kk, (BATCH, SEQ, HIDDEN_SIZE), jnp.float32)
    q = jax.random.normal(kq, (BATCH, SEQ, HIDDEN_SIZE), jnp.float32)

    # key-padding mask: True = masked; mask the last 2 keys of batch 1 only.
    mask_bool = jnp.zeros((BATCH, SEQ), dtype=bool).at[1, -2:].set(True)

    params = make_params(kp)

    out = gated_sa(v, k, q, mask_bool, params)
    out = jax.block_until_ready(out)

    ref = gated_sa_ref(v, k, q, mask_bool, params)
    # exact softmax divide -> tolerances tightened vs the previous version.
    np.testing.assert_allclose(np.asarray(out), np.asarray(ref),
                               rtol=1e-4, atol=1e-5)

    print("KERNEL_OK")
</pallas_src>

<mosaic_0001>
module attributes {stable_mosaic.version = 11 : i64} {
  func.func @kernel(%arg0: i32, %arg1: memref<48x32xf32, #tpu.memory_space<vmem>>, %arg2: memref<1x64xf32, #tpu.memory_space<vmem>>, %arg3: memref<64x64xf32, #tpu.memory_space<vmem>>, %arg4: memref<64x32xf32, #tpu.memory_space<vmem>>, %arg5: memref<32x96xf32, #tpu.memory_space<vmem>>, %arg6: memref<1x96xf32, #tpu.memory_space<vmem>>, %arg7: memref<32x32xf32, #tpu.memory_space<vmem>>, %arg8: memref<1x32xf32, #tpu.memory_space<vmem>>, %arg9: memref<16x2xf32, #tpu.memory_space<vmem>>, %arg10: memref<1x2xf32, #tpu.memory_space<vmem>>, %arg11: memref<4x128xf32, #tpu.memory_space<vmem>>) attributes {dimension_semantics = [#tpu.dimension_semantics<arbitrary>], iteration_bounds = array<i64: 1>, scalar_prefetch = 0 : i64, scratch_operands = 0 : i64, tpu.core_type = #tpu.core_type<tc>, window_params = [{pipeline_mode = #tpu.pipeline_mode<synchronous>, transform_indices = @transform_0, window_bounds = array<i64: 48, 32>}, {pipeline_mode = #tpu.pipeline_mode<synchronous>, transform_indices = @transform_1, window_bounds = array<i64: 1, 64>}, {pipeline_mode = #tpu.pipeline_mode<synchronous>, transform_indices = @transform_2, window_bounds = array<i64: 64, 64>}, {pipeline_mode = #tpu.pipeline_mode<synchronous>, transform_indices = @transform_3, window_bounds = array<i64: 64, 32>}, {pipeline_mode = #tpu.pipeline_mode<synchronous>, transform_indices = @transform_4, window_bounds = array<i64: 32, 96>}, {pipeline_mode = #tpu.pipeline_mode<synchronous>, transform_indices = @transform_5, window_bounds = array<i64: 1, 96>}, {pipeline_mode = #tpu.pipeline_mode<synchronous>, transform_indices = @transform_6, window_bounds = array<i64: 32, 32>}, {pipeline_mode = #tpu.pipeline_mode<synchronous>, transform_indices = @transform_7, window_bounds = array<i64: 1, 32>}, {pipeline_mode = #tpu.pipeline_mode<synchronous>, transform_indices = @transform_8, window_bounds = array<i64: 16, 2>}, {pipeline_mode = #tpu.pipeline_mode<synchronous>, transform_indices = @transform_9, window_bounds = array<i64: 1, 2>}, {pipeline_mode = #tpu.pipeline_mode<synchronous>, transform_indices = @transform_10, window_bounds = array<i64: 4, 128>}]} {
    %c0 = arith.constant 0 : index
    %c0_0 = arith.constant 0 : index
    %0 = vector.load %arg1[%c0, %c0_0] : memref<48x32xf32, #tpu.memory_space<vmem>>, vector<48x32xf32>
    %c0_1 = arith.constant 0 : index
    %c0_2 = arith.constant 0 : index
    %1 = vector.load %arg5[%c0_1, %c0_2] : memref<32x96xf32, #tpu.memory_space<vmem>>, vector<32x96xf32>
    %cst = arith.constant dense<0.000000e+00> : vector<48x96xf32>
    %2 = tpu.matmul %0, %1, %cst {dimension_numbers = #tpu.dot_dimension_numbers<[1], [0], [0], [1], [0, 0, 1, 1], [], []>} : vector<48x32xf32>, vector<32x96xf32>, vector<48x96xf32> -> vector<48x96xf32>
    %c0_3 = arith.constant 0 : index
    %c0_4 = arith.constant 0 : index
    %3 = vector.load %arg6[%c0_3, %c0_4] : memref<1x96xf32, #tpu.memory_space<vmem>>, vector<1x96xf32>
    %4 = vector.broadcast %3 : vector<1x96xf32> to vector<48x96xf32>
    %5 = arith.addf %2, %4 : vector<48x96xf32>
    %6 = vector.extract_strided_slice %5 {offsets = [0, 0], sizes = [16, 32], strides = [1, 1]} : vector<48x96xf32> to vector<16x32xf32>
    %7 = vector.extract_strided_slice %5 {offsets = [16, 32], sizes = [16, 32], strides = [1, 1]} : vector<48x96xf32> to vector<16x32xf32>
    %8 = vector.extract_strided_slice %5 {offsets = [32, 64], sizes = [16, 32], strides = [1, 1]} : vector<48x96xf32> to vector<16x32xf32>
    %9 = tpu.concatenate %8, %7 in 0 : vector<16x32xf32>, vector<16x32xf32> -> vector<32x32xf32>
    %c0_5 = arith.constant 0 : index
    %c0_6 = arith.constant 0 : index
    %10 = vector.load %arg7[%c0_5, %c0_6] : memref<32x32xf32, #tpu.memory_space<vmem>>, vector<32x32xf32>
    %cst_7 = arith.constant dense<0.000000e+00> : vector<32x32xf32>
    %11 = tpu.matmul %9, %10, %cst_7 {dimension_numbers = #tpu.dot_dimension_numbers<[1], [0], [0], [1], [0, 0, 1, 1], [], []>} : vector<32x32xf32>, vector<32x32xf32>, vector<32x32xf32> -> vector<32x32xf32>
    %c0_8 = arith.constant 0 : index
    %c0_9 = arith.constant 0 : index
    %12 = vector.load %arg8[%c0_8, %c0_9] : memref<1x32xf32, #tpu.memory_space<vmem>>, vector<1x32xf32>
    %13 = vector.broadcast %12 : vector<1x32xf32> to vector<32x32xf32>
    %14 = arith.addf %11, %13 : vector<32x32xf32>
    %15 = vector.extract_strided_slice %14 {offsets = [0, 0], sizes = [16, 16], strides = [1, 1]} : vector<32x32xf32> to vector<16x16xf32>
    %16 = vector.extract_strided_slice %14 {offsets = [16, 16], sizes = [16, 16], strides = [1, 1]} : vector<32x32xf32> to vector<16x16xf32>
    %17 = arith.mulf %15, %16 : vector<16x16xf32>
    %c0_10 = arith.constant 0 : index
    %c0_11 = arith.constant 0 : index
    %18 = vector.load %arg9[%c0_10, %c0_11] : memref<16x2xf32, #tpu.memory_space<vmem>>, vector<16x2xf32>
    %cst_12 = arith.constant dense<0.000000e+00> : vector<16x2xf32>
    %19 = tpu.matmul %17, %18, %cst_12 {dimension_numbers = #tpu.dot_dimension_numbers<[1], [0], [0], [1], [0, 0, 1, 1], [], []>} : vector<16x16xf32>, vector<16x2xf32>, vector<16x2xf32> -> vector<16x2xf32>
    %c0_13 = arith.constant 0 : index
    %c0_14 = arith.constant 0 : index
    %20 = vector.load %arg10[%c0_13, %c0_14] : memref<1x2xf32, #tpu.memory_space<vmem>>, vector<1x2xf32>
    %21 = vector.broadcast %20 : vector<1x2xf32> to vector<16x2xf32>
    %22 = arith.addf %19, %21 : vector<16x2xf32>
    %23 = arith.negf %22 : vector<16x2xf32>
    %24 = math.exp %23 : vector<16x2xf32>
    %cst_15 = arith.constant 1.000000e+00 : f32
    %25 = vector.broadcast %cst_15 : f32 to vector<16x2xf32>
    %26 = arith.addf %25, %24 : vector<16x2xf32>
    %27 = arith.divf %25, %26 : vector<16x2xf32>
    %28 = vector.extract_strided_slice %27 {offsets = [0, 0], sizes = [16, 1], strides = [1, 1]} : vector<16x2xf32> to vector<16x1xf32>
    %29 = vector.broadcast %28 : vector<16x1xf32> to vector<16x32xf32>
    %30 = arith.mulf %29, %7 : vector<16x32xf32>
    %31 = vector.extract_strided_slice %27 {offsets = [0, 1], sizes = [16, 1], strides = [1, 1]} : vector<16x2xf32> to vector<16x1xf32>
    %cst_16 = arith.constant 0.353553385 : f32
    %32 = vector.broadcast %cst_16 : f32 to vector<16x1xf32>
    %33 = arith.mulf %31, %32 : vector<16x1xf32>
    %34 = vector.broadcast %33 : vector<16x1xf32> to vector<16x32xf32>
    %35 = arith.mulf %34, %8 : vector<16x32xf32>
    %c0_17 = arith.constant 0 : index
    %c0_18 = arith.constant 0 : index
    %36 = vector.load %arg4[%c0_17, %c0_18] : memref<64x32xf32, #tpu.memory_space<vmem>>, vector<64x32xf32>
    %37 = tpu.concatenate %35, %35, %35, %35 in 0 : vector<16x32xf32>, vector<16x32xf32>, vector<16x32xf32>, vector<16x32xf32> -> vector<64x32xf32>
    %38 = arith.mulf %37, %36 : vector<64x32xf32>
    %39 = tpu.concatenate %30, %30, %30, %30 in 0 : vector<16x32xf32>, vector<16x32xf32>, vector<16x32xf32>, vector<16x32xf32> -> vector<64x32xf32>
    %40 = tpu.concatenate %6, %6, %6, %6 in 0 : vector<16x32xf32>, vector<16x32xf32>, vector<16x32xf32>, vector<16x32xf32> -> vector<64x32xf32>
    %41 = arith.mulf %40, %36 : vector<64x32xf32>
    %cst_19 = arith.constant dense<0.000000e+00> : vector<64x64xf32>
    %42 = tpu.matmul %38, %39, %cst_19 {dimension_numbers = #tpu.dot_dimension_numbers<[1], [1], [0], [0], [0, 0, 1, 0], [], []>} : vector<64x32xf32>, vector<64x32xf32>, vector<64x64xf32> -> vector<64x64xf32>
    %c0_20 = arith.constant 0 : index
    %c0_21 = arith.constant 0 : index
    %43 = vector.load %arg2[%c0_20, %c0_21] : memref<1x64xf32, #tpu.memory_space<vmem>>, vector<1x64xf32>
    %cst_22 = arith.constant 0.000000e+00 : f32
    %44 = vector.broadcast %cst_22 : f32 to vector<1x64xf32>
    %45 = arith.cmpf ogt, %43, %44 : vector<1x64xf32>
    %cst_23 = arith.constant -1.000000e+09 : f32
    %46 = vector.shape_cast %45 : vector<1x64xi1> to vector<1x64xi1>
    %47 = vector.broadcast %46 : vector<1x64xi1> to vector<64x64xi1>
    %48 = vector.broadcast %cst_23 : f32 to vector<64x64xf32>
    %49 = arith.select %47, %48, %42 : vector<64x64xi1>, vector<64x64xf32>
    %c0_24 = arith.constant 0 : index
    %c0_25 = arith.constant 0 : index
    %50 = vector.load %arg3[%c0_24, %c0_25] : memref<64x64xf32, #tpu.memory_space<vmem>>, vector<64x64xf32>
    %51 = arith.addf %49, %50 : vector<64x64xf32>
    %cst_26 = arith.constant dense<0xFF800000> : vector<64xf32>
    %52 = vector.multi_reduction <maximumf>, %51, %cst_26 [1] : vector<64x64xf32> to vector<64xf32>
    %53 = vector.shape_cast %52 : vector<64xf32> to vector<64x1xf32>
    %54 = vector.broadcast %53 : vector<64x1xf32> to vector<64x64xf32>
    %55 = arith.subf %51, %54 : vector<64x64xf32>
    %56 = math.exp %55 : vector<64x64xf32>
    %cst_27 = arith.constant dense<0.000000e+00> : vector<64xf32>
    %57 = vector.multi_reduction <add>, %56, %cst_27 [1] : vector<64x64xf32> to vector<64xf32>
    %58 = vector.shape_cast %57 : vector<64xf32> to vector<64x1xf32>
    %59 = vector.broadcast %58 : vector<64x1xf32> to vector<64x64xf32>
    %60 = arith.divf %56, %59 : vector<64x64xf32>
    %cst_28 = arith.constant dense<0.000000e+00> : vector<64x32xf32>
    %61 = tpu.matmul %60, %41, %cst_28 {dimension_numbers = #tpu.dot_dimension_numbers<[1], [0], [0], [1], [0, 0, 1, 1], [], []>} : vector<64x64xf32>, vector<64x32xf32>, vector<64x32xf32> -> vector<64x32xf32>
    %62 = vector.extract_strided_slice %61 {offsets = [0, 0], sizes = [16, 32], strides = [1, 1]} : vector<64x32xf32> to vector<16x32xf32>
    %63 = vector.extract_strided_slice %61 {offsets = [16, 0], sizes = [16, 32], strides = [1, 1]} : vector<64x32xf32> to vector<16x32xf32>
    %64 = arith.addf %62, %63 : vector<16x32xf32>
    %65 = vector.extract_strided_slice %61 {offsets = [32, 0], sizes = [16, 32], strides = [1, 1]} : vector<64x32xf32> to vector<16x32xf32>
    %66 = arith.addf %64, %65 : vector<16x32xf32>
    %67 = vector.extract_strided_slice %61 {offsets = [48, 0], sizes = [16, 32], strides = [1, 1]} : vector<64x32xf32> to vector<16x32xf32>
    %68 = arith.addf %66, %67 : vector<16x32xf32>
    %69 = vector.extract_strided_slice %68 {offsets = [0, 0], sizes = [4, 32], strides = [1, 1]} : vector<16x32xf32> to vector<4x32xf32>
    %70 = vector.extract_strided_slice %68 {offsets = [4, 0], sizes = [4, 32], strides = [1, 1]} : vector<16x32xf32> to vector<4x32xf32>
    %71 = vector.extract_strided_slice %68 {offsets = [8, 0], sizes = [4, 32], strides = [1, 1]} : vector<16x32xf32> to vector<4x32xf32>
    %72 = vector.extract_strided_slice %68 {offsets = [12, 0], sizes = [4, 32], strides = [1, 1]} : vector<16x32xf32> to vector<4x32xf32>
    %73 = tpu.concatenate %69, %70, %71, %72 in 1 : vector<4x32xf32>, vector<4x32xf32>, vector<4x32xf32>, vector<4x32xf32> -> vector<4x128xf32>
    %c0_29 = arith.constant 0 : index
    %c0_30 = arith.constant 0 : index
    %74 = vector.load %arg11[%c0_29, %c0_30] : memref<4x128xf32, #tpu.memory_space<vmem>>, vector<4x128xf32>
    tpu.vector_store %arg11[%c0_29, %c0_30], %73 {strides = array<i32>} : memref<4x128xf32, #tpu.memory_space<vmem>>, vector<4x128xf32>,
    return
  }
  func.func @transform_0(%arg0: i32) -> (i32, i32) {
    %c0_i32 = arith.constant 0 : i32
    %c0_i32_0 = arith.constant 0 : i32
    %c0_i32_1 = arith.constant 0 : i32
    return %c0_i32, %c0_i32_0 : i32, i32
  }
  func.func @transform_1(%arg0: i32) -> (i32, i32) {
    %c0_i32 = arith.constant 0 : i32
    %c0_i32_0 = arith.constant 0 : i32
    %c0_i32_1 = arith.constant 0 : i32
    return %c0_i32, %c0_i32_0 : i32, i32
  }
  func.func @transform_2(%arg0: i32) -> (i32, i32) {
    %c0_i32 = arith.constant 0 : i32
    %c0_i32_0 = arith.constant 0 : i32
    %c0_i32_1 = arith.constant 0 : i32
    return %c0_i32, %c0_i32_0 : i32, i32
  }
  func.func @transform_3(%arg0: i32) -> (i32, i32) {
    %c0_i32 = arith.constant 0 : i32
    %c0_i32_0 = arith.constant 0 : i32
    %c0_i32_1 = arith.constant 0 : i32
    return %c0_i32, %c0_i32_0 : i32, i32
  }
  func.func @transform_4(%arg0: i32) -> (i32, i32) {
    %c0_i32 = arith.constant 0 : i32
    %c0_i32_0 = arith.constant 0 : i32
    %c0_i32_1 = arith.constant 0 : i32
    return %c0_i32, %c0_i32_0 : i32, i32
  }
  func.func @transform_5(%arg0: i32) -> (i32, i32) {
    %c0_i32 = arith.constant 0 : i32
    %c0_i32_0 = arith.constant 0 : i32
    %c0_i32_1 = arith.constant 0 : i32
    return %c0_i32, %c0_i32_0 : i32, i32
  }
  func.func @transform_6(%arg0: i32) -> (i32, i32) {
    %c0_i32 = arith.constant 0 : i32
    %c0_i32_0 = arith.constant 0 : i32
    %c0_i32_1 = arith.constant 0 : i32
    return %c0_i32, %c0_i32_0 : i32, i32
  }
  func.func @transform_7(%arg0: i32) -> (i32, i32) {
    %c0_i32 = arith.constant 0 : i32
    %c0_i32_0 = arith.constant 0 : i32
    %c0_i32_1 = arith.constant 0 : i32
    return %c0_i32, %c0_i32_0 : i32, i32
  }
  func.func @transform_8(%arg0: i32) -> (i32, i32) {
    %c0_i32 = arith.constant 0 : i32
    %c0_i32_0 = arith.constant 0 : i32
    %c0_i32_1 = arith.constant 0 : i32
    return %c0_i32, %c0_i32_0 : i32, i32
  }
  func.func @transform_9(%arg0: i32) -> (i32, i32) {
    %c0_i32 = arith.constant 0 : i32
    %c0_i32_0 = arith.constant 0 : i32
    %c0_i32_1 = arith.constant 0 : i32
    return %c0_i32, %c0_i32_0 : i32, i32
  }
  func.func @transform_10(%arg0: i32) -> (i32, i32) {
    %c0_i32 = arith.constant 0 : i32
    %c0_i32_0 = arith.constant 0 : i32
    %c0_i32_1 = arith.constant 0 : i32
    return %c0_i32, %c0_i32_0 : i32, i32
  }
}

</mosaic_0001>

<llo_original>
// kernel: tpu_custom_call.1
$region0: #{tpu_custom_call.1}
  #allocation0 [shape = 'u32[]', space=smem, size = 0x4, offset = 0x4, fixed_abs, tag = 'smem constant byte address 0x4 - core index']
  #allocation1 [shape = 'u32[144,128]{1,0:T(1,128)}', space=vmem, size = 0x12000, scoped, tag = 'internal scratch']
  %s0 = inlined_call_operand.vmem [shape: f32[48,32], index: 0, kind: input, shape index: {}]
  %s1 = inlined_call_operand.vmem [shape: f32[1,64], index: 1, kind: input, shape index: {}]
  %s2 = inlined_call_operand.vmem [shape: f32[64,64], index: 2, kind: input, shape index: {}]
  %s3 = inlined_call_operand.vmem [shape: f32[64,32], index: 3, kind: input, shape index: {}]
  %s4 = inlined_call_operand.vmem [shape: f32[32,96], index: 4, kind: input, shape index: {}]
  %s5 = inlined_call_operand.vmem [shape: f32[1,96], index: 5, kind: input, shape index: {}]
  %s6 = inlined_call_operand.vmem [shape: f32[32,32], index: 6, kind: input, shape index: {}]
  %s7 = inlined_call_operand.vmem [shape: f32[1,32], index: 7, kind: input, shape index: {}]
  %s8 = inlined_call_operand.vmem [shape: f32[16,2], index: 8, kind: input, shape index: {}]
  %s9 = inlined_call_operand.vmem [shape: f32[1,2], index: 9, kind: input, shape index: {}]
  %s10 = inlined_call_operand.hbm [shape: f32[4,128], index: 10, kind: output, shape index: {}]
  %s11 = sld [smem:[#allocation0]]
  $region50: #{tpu_custom_call.1} parent=0
    _
  %s13 = ssub.s32 1, %s11
  %s14 = scalar_select 0, %s13, %s11
  $region1: #{tpu_custom_call.1} parent=0
    #allocation2 [shape = 'u8[2048]{0}', space=vmem, size = 0x800, scoped, tag = 'output window, operand 0, single buffered']
    #allocation3 [shape = 's32[1]{0}', space=sflag, size = 0x4, scoped, tag = 'scoped memory for tpu_custom_call.1']
    %15 = vsyncpa [#allocation3], 0
    // Predicated region
    $region2: #{tpu_custom_call.1} parent=1 // pred_check
      _
    $region3: #{tpu_custom_call.1} parent=1 // pred_check_branch
      %17 = sbr.rel (0) target = $region5
    $region4: #{tpu_custom_call.1} parent=1 // pred_region
      _
    $region5: #{tpu_custom_call.1} parent=1 // pred_fallthru
      _
    // Predicated region
    $region6: #{tpu_custom_call.1} parent=1 // pred_check
      _
    $region7: #{tpu_custom_call.1} parent=1 // pred_check_branch
      %19 = sbr.rel (0) target = $region9
    $region8: #{tpu_custom_call.1} parent=1 // pred_region
      _
    $region9: #{tpu_custom_call.1} parent=1 // pred_fallthru
      _
    // Predicated region
    $region10: #{tpu_custom_call.1} parent=1 // pred_check
      _
    $region11: #{tpu_custom_call.1} parent=1 // pred_check_branch
      %21 = sbr.rel (0) target = $region13
    $region12: #{tpu_custom_call.1} parent=1 // pred_region
      _
    $region13: #{tpu_custom_call.1} parent=1 // pred_fallthru
      _
    // Predicated region
    $region14: #{tpu_custom_call.1} parent=1 // pred_check
      _
    $region15: #{tpu_custom_call.1} parent=1 // pred_check_branch
      %23 = sbr.rel (0) target = $region17
    $region16: #{tpu_custom_call.1} parent=1 // pred_region
      _
    $region17: #{tpu_custom_call.1} parent=1 // pred_fallthru
      _
    // Predicated region
    $region18: #{tpu_custom_call.1} parent=1 // pred_check
      _
    $region19: #{tpu_custom_call.1} parent=1 // pred_check_branch
      %25 = sbr.rel (0) target = $region21
    $region20: #{tpu_custom_call.1} parent=1 // pred_region
      _
    $region21: #{tpu_custom_call.1} parent=1 // pred_fallthru
      _
    // Predicated region
    $region22: #{tpu_custom_call.1} parent=1 // pred_check
      _
    $region23: #{tpu_custom_call.1} parent=1 // pred_check_branch
      %27 = sbr.rel (0) target = $region25
    $region24: #{tpu_custom_call.1} parent=1 // pred_region
      _
    $region25: #{tpu_custom_call.1} parent=1 // pred_fallthru
      _
    // Predicated region
    $region26: #{tpu_custom_call.1} parent=1 // pred_check
      _
    $region27: #{tpu_custom_call.1} parent=1 // pred_check_branch
      %29 = sbr.rel (0) target = $region29
    $region28: #{tpu_custom_call.1} parent=1 // pred_region
      _
    $region29: #{tpu_custom_call.1} parent=1 // pred_fallthru
      _
    // Predicated region
    $region30: #{tpu_custom_call.1} parent=1 // pred_check
      _
    $region31: #{tpu_custom_call.1} parent=1 // pred_check_branch
      %31 = sbr.rel (0) target = $region33
    $region32: #{tpu_custom_call.1} parent=1 // pred_region
      _
    $region33: #{tpu_custom_call.1} parent=1 // pred_fallthru
      _
    // Predicated region
    $region34: #{tpu_custom_call.1} parent=1 // pred_check
      _
    $region35: #{tpu_custom_call.1} parent=1 // pred_check_branch
      %33 = sbr.rel (0) target = $region37
    $region36: #{tpu_custom_call.1} parent=1 // pred_region
      _
    $region37: #{tpu_custom_call.1} parent=1 // pred_fallthru
      _
    // Predicated region
    $region38: #{tpu_custom_call.1} parent=1 // pred_check
      _
    $region39: #{tpu_custom_call.1} parent=1 // pred_check_branch
      %35 = sbr.rel (0) target = $region41
    $region40: #{tpu_custom_call.1} parent=1 // pred_region
      _
    $region41: #{tpu_custom_call.1} parent=1 // pred_fallthru
      _
    %v36 = vld [vmem:[%s0] sm:$0xff]
    %v37 = vld [vmem:[%s0 + $0x8] sm:$0xff]
    %v38 = vld [vmem:[%s0 + $0x10] sm:$0xff]
    %v39 = vld [vmem:[%s0 + $0x18] sm:$0xff]
    %v40 = vld [vmem:[%s0 + $0x20] sm:$0xff]
    %v41 = vld [vmem:[%s0 + $0x28] sm:$0xff]
    %v42 = vld [vmem:[%s4] sm:$0xff]
    %v43 = vld [vmem:[%s4 + $0x8] sm:$0xff]
    %v44 = vld [vmem:[%s4 + $0x10] sm:$0xff]
    %v45 = vld [vmem:[%s4 + $0x18] sm:$0xff]
    %v46 = vld [vmem:[%s5] sm:$0x1]
    %v48 = vlaneseq
    %v49 = vshrl.u32 %v48, 7
    %v50 = vsub.s32 0, %v49
    %v51 = vrot.slane %v46, %v50
    %vm53 = vcmask 261120
    %v55 = vsel %vm53, %v36, 0
    %v58 = vsel %vm53, %v37, 0
    %v61 = vsel %vm53, %v38, 0
    %v64 = vsel %vm53, %v39, 0
    %v67 = vsel %vm53, %v40, 0
    %v70 = vsel %vm53, %v41, 0
    %72 = vmatprep.subr.mxu0 0.0
    %73 = vmatpush1.msra.mxu0 %v42
    %74 = vmatprep.subr.mxu0 0.0
    %75 = vmatpush1.msra.mxu0 %v43
    %76 = vmatprep.subr.mxu0 0.0
    %77 = vmatpush1.msra.mxu0 %v44
    %78 = vmatprep.subr.mxu0 0.0
    %79 = vmatpush1.msra.mxu0 %v45
    %80 = vmatprep.subr.mxu0 0.0
    %81 = vmatpush1.msra.mxu0 0.0
    %82 = vmatprep.subr.mxu0 0.0
    %83 = vmatpush1.msra.mxu0 0.0
    %84 = vmatprep.subr.mxu0 0.0
    %85 = vmatpush1.msra.mxu0 0.0
    %86 = vmatprep.subr.mxu0 0.0
    %87 = vmatpush1.msra.mxu0 0.0
    %88 = vmatprep.subr.mxu0 0.0
    %89 = vmatpush1.msra.mxu0 0.0
    %90 = vmatprep.subr.mxu0 0.0
    %91 = vmatpush1.msra.mxu0 0.0
    %92 = vmatprep.subr.mxu0 0.0
    %93 = vmatpush1.msra.mxu0 0.0
    %94 = vmatprep.subr.mxu0 0.0
    %95 = vmatpush1.msra.mxu0 0.0
    %96 = vmatprep.subr.mxu0 0.0
    %97 = vmatpush1.msra.mxu0 0.0
    %98 = vmatprep.subr.mxu0 0.0
    %99 = vmatpush1.msra.mxu0 0.0
    %100 = vmatprep.subr.mxu0 0.0
    %101 = vmatpush1.msra.mxu0 0.0
    %102 = vmatprep.subr.mxu0 0.0
    %103 = vmatpush1.msra.mxu0 0.0
    %104 = vmatprep.subr.mxu0 0.0
    %105 = vmatpush1.msra.mxu0 0.0
    %106 = vmatprep.subr.mxu0 0.0
    %107 = vmatpush1.msra.mxu0 0.0
    %108 = vmatprep.subr.mxu0 0.0
    %109 = vmatpush1.msra.mxu0 0.0
    %110 = vmatprep.subr.mxu0 0.0
    %111 = vmatpush1.msra.mxu0 0.0
    %112 = vmatprep.subr.mxu0 0.0
    %113 = vmatpush1.msra.mxu0 0.0
    %114 = vmatprep.subr.mxu0 0.0
    %115 = vmatpush1.msra.mxu0 0.0
    %116 = vmatprep.subr.mxu0 0.0
    %117 = vmatpush1.msra.mxu0 0.0
    %118 = vmatprep.subr.mxu0 0.0
    %119 = vmatpush1.msra.mxu0 0.0
    %120 = vmatprep.subr.mxu0 0.0
    %121 = vmatpush1.msra.mxu0 0.0
    %122 = vmatprep.subr.mxu0 0.0
    %123 = vmatpush1.msra.mxu0 0.0
    %124 = vmatprep.subr.mxu0 0.0
    %125 = vmatpush1.msra.mxu0 0.0
    %126 = vmatprep.subr.mxu0 0.0
    %127 = vmatpush1.msra.mxu0 0.0
    %128 = vmatprep.subr.mxu0 0.0
    %129 = vmatpush1.msra.mxu0 0.0
    %130 = vmatprep.subr.mxu0 0.0
    %131 = vmatpush1.msra.mxu0 0.0
    %132 = vmatprep.subr.mxu0 0.0
    %133 = vmatpush1.msra.mxu0 0.0
    %134 = vmatprep.subr.mxu0 0.0
    %135 = vmatpush1.msra.mxu0 0.0
    %136 = vmatprep.mubr.f32.mxu0 0.0
    %137 = vmatmul.mubr.f32.gmra.mrb[0].mxu0 %v55
    %v138 = vpop.f32.mrb[0].mxu0
    %v139 = vadd.f32 %v51, %v138
    %v140 = vpop.f32.mrb[0].mxu0
    %141 = vmatprep.mubr.f32.mxu0 0.0
    %142 = vmatmul.mubr.f32.gmra.mrb[0].mxu0 %v58
    %v143 = vpop.f32.mrb[0].mxu0
    %v144 = vadd.f32 %v51, %v143
    %v145 = vpop.f32.mrb[0].mxu0
    %146 = vmatprep.mubr.f32.mxu0 0.0
    %147 = vmatmul.mubr.f32.gmra.mrb[0].mxu0 %v61
    %v148 = vpop.f32.mrb[0].mxu0
    %v149 = vadd.f32 %v51, %v148
    %v150 = vpop.f32.mrb[0].mxu0
    %151 = vmatprep.mubr.f32.mxu0 0.0
    %152 = vmatmul.mubr.f32.gmra.mrb[0].mxu0 %v64
    %v153 = vpop.f32.mrb[0].mxu0
    %v154 = vadd.f32 %v51, %v153
    %v155 = vpop.f32.mrb[0].mxu0
    %156 = vmatprep.mubr.f32.mxu0 0.0
    %157 = vmatmul.mubr.f32.gmra.mrb[0].mxu0 %v67
    %v158 = vpop.f32.mrb[0].mxu0
    %v159 = vadd.f32 %v51, %v158
    %v160 = vpop.f32.mrb[0].mxu0
    %161 = vmatprep.mubr.f32.mxu0 0.0
    %162 = vmatmul.mubr.f32.gmra.mrb[0].mxu0 %v70
    %v163 = vpop.f32.mrb[0].mxu0
    %v164 = vadd.f32 %v51, %v163
    %v165 = vpop.f32.mrb[0].mxu0
    %166 = vdwg.mxu0
    %169 = vrot.lane.b32.xlu0 %v149, 32
    %v170 = vpop.permute.xlu0 %169
    %171 = vrot.lane.b32.xlu0 %v154, 32
    %v172 = vpop.permute.xlu0 %171
    %v173 = vld [vmem:[%s6] sm:$0xff]
    %v174 = vld [vmem:[%s6 + $0x8] sm:$0xff]
    %v175 = vld [vmem:[%s6 + $0x10] sm:$0xff]
    %v176 = vld [vmem:[%s6 + $0x18] sm:$0xff]
    %v177 = vld [vmem:[%s7] sm:$0x1]
    %v179 = vlaneseq
    %v180 = vshrl.u32 %v179, 7
    %v181 = vsub.s32 0, %v180
    %v182 = vrot.slane %v177, %v181
    %186 = vrot.lane.b32.xlu0 %v159, 64
    %v187 = vpop.permute.xlu0 %186
    %188 = vrot.lane.b32.xlu0 %v164, 64
    %v189 = vpop.permute.xlu0 %188
    %190 = vrot.lane.b32.xlu0 %v170, 64
    %v191 = vpop.permute.xlu0 %190
    %192 = vrot.lane.b32.xlu0 %v172, 64
    %v193 = vpop.permute.xlu0 %192
    %v194 = vsel %vm53, %v187, 0
    %v196 = vsel %vm53, %v189, 0
    %v198 = vsel %vm53, %v191, 0
    %v200 = vsel %vm53, %v193, 0
    %202 = vmatprep.subr.mxu0 0.0
    %203 = vmatpush1.msra.mxu0 %v173
    %204 = vmatprep.subr.mxu0 0.0
    %205 = vmatpush1.msra.mxu0 %v174
    %206 = vmatprep.subr.mxu0 0.0
    %207 = vmatpush1.msra.mxu0 %v175
    %208 = vmatprep.subr.mxu0 0.0
    %209 = vmatpush1.msra.mxu0 %v176
    %210 = vmatprep.subr.mxu0 0.0
    %211 = vmatpush1.msra.mxu0 0.0
    %212 = vmatprep.subr.mxu0 0.0
    %213 = vmatpush1.msra.mxu0 0.0
    %214 = vmatprep.subr.mxu0 0.0
    %215 = vmatpush1.msra.mxu0 0.0
    %216 = vmatprep.subr.mxu0 0.0
    %217 = vmatpush1.msra.mxu0 0.0
    %218 = vmatprep.subr.mxu0 0.0
    %219 = vmatpush1.msra.mxu0 0.0
    %220 = vmatprep.subr.mxu0 0.0
    %221 = vmatpush1.msra.mxu0 0.0
    %222 = vmatprep.subr.mxu0 0.0
    %223 = vmatpush1.msra.mxu0 0.0
    %224 = vmatprep.subr.mxu0 0.0
    %225 = vmatpush1.msra.mxu0 0.0
    %226 = vmatprep.subr.mxu0 0.0
    %227 = vmatpush1.msra.mxu0 0.0
    %228 = vmatprep.subr.mxu0 0.0
    %229 = vmatpush1.msra.mxu0 0.0
    %230 = vmatprep.subr.mxu0 0.0
    %231 = vmatpush1.msra.mxu0 0.0
    %232 = vmatprep.subr.mxu0 0.0
    %233 = vmatpush1.msra.mxu0 0.0
    %234 = vmatprep.subr.mxu0 0.0
    %235 = vmatpush1.msra.mxu0 0.0
    %236 = vmatprep.subr.mxu0 0.0
    %237 = vmatpush1.msra.mxu0 0.0
    %238 = vmatprep.subr.mxu0 0.0
    %239 = vmatpush1.msra.mxu0 0.0
    %240 = vmatprep.subr.mxu0 0.0
    %241 = vmatpush1.msra.mxu0 0.0
    %242 = vmatprep.subr.mxu0 0.0
    %243 = vmatpush1.msra.mxu0 0.0
    %244 = vmatprep.subr.mxu0 0.0
    %245 = vmatpush1.msra.mxu0 0.0
    %246 = vmatprep.subr.mxu0 0.0
    %247 = vmatpush1.msra.mxu0 0.0
    %248 = vmatprep.subr.mxu0 0.0
    %249 = vmatpush1.msra.mxu0 0.0
    %250 = vmatprep.subr.mxu0 0.0
    %251 = vmatpush1.msra.mxu0 0.0
    %252 = vmatprep.subr.mxu0 0.0
    %253 = vmatpush1.msra.mxu0 0.0
    %254 = vmatprep.subr.mxu0 0.0
    %255 = vmatpush1.msra.mxu0 0.0
    %256 = vmatprep.subr.mxu0 0.0
    %257 = vmatpush1.msra.mxu0 0.0
    %258 = vmatprep.subr.mxu0 0.0
    %259 = vmatpush1.msra.mxu0 0.0
    %260 = vmatprep.subr.mxu0 0.0
    %261 = vmatpush1.msra.mxu0 0.0
    %262 = vmatprep.subr.mxu0 0.0
    %263 = vmatpush1.msra.mxu0 0.0
    %264 = vmatprep.subr.mxu0 0.0
    %265 = vmatpush1.msra.mxu0 0.0
    %266 = vmatprep.mubr.f32.mxu0 0.0
    %267 = vmatmul.mubr.f32.gmra.mrb[0].mxu0 %v194
    %v268 = vpop.f32.mrb[0].mxu0
    %v269 = vadd.f32 %v182, %v268
    %v270 = vpop.f32.mrb[0].mxu0
    %271 = vmatprep.mubr.f32.mxu0 0.0
    %272 = vmatmul.mubr.f32.gmra.mrb[0].mxu0 %v196
    %v273 = vpop.f32.mrb[0].mxu0
    %v274 = vadd.f32 %v182, %v273
    %v275 = vpop.f32.mrb[0].mxu0
    %276 = vmatprep.mubr.f32.mxu0 0.0
    %277 = vmatmul.mubr.f32.gmra.mrb[0].mxu0 %v198
    %v278 = vpop.f32.mrb[0].mxu0
    %v279 = vadd.f32 %v182, %v278
    %v280 = vpop.f32.mrb[0].mxu0
    %281 = vmatprep.mubr.f32.mxu0 0.0
    %282 = vmatmul.mubr.f32.gmra.mrb[0].mxu0 %v200
    %v283 = vpop.f32.mrb[0].mxu0
    %v284 = vadd.f32 %v182, %v283
    %v285 = vpop.f32.mrb[0].mxu0
    %286 = vdwg.mxu0
    %289 = vrot.lane.b32.xlu0 %v279, 112
    %v290 = vpop.permute.xlu0 %289
    %291 = vrot.lane.b32.xlu0 %v284, 112
    %v292 = vpop.permute.xlu0 %291
    %v295 = vmul.f32 %v269, %v290
    %v296 = vmul.f32 %v274, %v292
    %v297 = vld [vmem:[%s8] sm:$0xff]
    %v298 = vld [vmem:[%s8 + $0x8] sm:$0xff]
    %v299 = vld [vmem:[%s9] sm:$0x1]
    %v301 = vlaneseq
    %v302 = vshrl.u32 %v301, 7
    %v303 = vsub.s32 0, %v302
    %v304 = vrot.slane %v299, %v303
    %vm306 = vcmask 130048
    %v308 = vsel %vm306, %v295, 0
    %v311 = vsel %vm306, %v296, 0
    %313 = vmatprep.subr.mxu0 0.0
    %314 = vmatpush1.msra.mxu0 %v297
    %315 = vmatprep.subr.mxu0 0.0
    %316 = vmatpush1.msra.mxu0 %v298
    %317 = vmatprep.subr.mxu0 0.0
    %318 = vmatpush1.msra.mxu0 0.0
    %319 = vmatprep.subr.mxu0 0.0
    %320 = vmatpush1.msra.mxu0 0.0
    %321 = vmatprep.subr.mxu0 0.0
    %322 = vmatpush1.msra.mxu0 0.0
    %323 = vmatprep.subr.mxu0 0.0
    %324 = vmatpush1.msra.mxu0 0.0
    %325 = vmatprep.subr.mxu0 0.0
    %326 = vmatpush1.msra.mxu0 0.0
    %327 = vmatprep.subr.mxu0 0.0
    %328 = vmatpush1.msra.mxu0 0.0
    %329 = vmatprep.subr.mxu0 0.0
    %330 = vmatpush1.msra.mxu0 0.0
    %331 = vmatprep.subr.mxu0 0.0
    %332 = vmatpush1.msra.mxu0 0.0
    %333 = vmatprep.subr.mxu0 0.0
    %334 = vmatpush1.msra.mxu0 0.0
    %335 = vmatprep.subr.mxu0 0.0
    %336 = vmatpush1.msra.mxu0 0.0
    %337 = vmatprep.subr.mxu0 0.0
    %338 = vmatpush1.msra.mxu0 0.0
    %339 = vmatprep.subr.mxu0 0.0
    %340 = vmatpush1.msra.mxu0 0.0
    %341 = vmatprep.subr.mxu0 0.0
    %342 = vmatpush1.msra.mxu0 0.0
    %343 = vmatprep.subr.mxu0 0.0
    %344 = vmatpush1.msra.mxu0 0.0
    %345 = vmatprep.subr.mxu0 0.0
    %346 = vmatpush1.msra.mxu0 0.0
    %347 = vmatprep.subr.mxu0 0.0
    %348 = vmatpush1.msra.mxu0 0.0
    %349 = vmatprep.subr.mxu0 0.0
    %350 = vmatpush1.msra.mxu0 0.0
    %351 = vmatprep.subr.mxu0 0.0
    %352 = vmatpush1.msra.mxu0 0.0
    %353 = vmatprep.subr.mxu0 0.0
    %354 = vmatpush1.msra.mxu0 0.0
    %355 = vmatprep.subr.mxu0 0.0
    %356 = vmatpush1.msra.mxu0 0.0
    %357 = vmatprep.subr.mxu0 0.0
    %358 = vmatpush1.msra.mxu0 0.0
    %359 = vmatprep.subr.mxu0 0.0
    %360 = vmatpush1.msra.mxu0 0.0
    %361 = vmatprep.subr.mxu0 0.0
    %362 = vmatpush1.msra.mxu0 0.0
    %363 = vmatprep.subr.mxu0 0.0
    %364 = vmatpush1.msra.mxu0 0.0
    %365 = vmatprep.subr.mxu0 0.0
    %366 = vmatpush1.msra.mxu0 0.0
    %367 = vmatprep.subr.mxu0 0.0
    %368 = vmatpush1.msra.mxu0 0.0
    %369 = vmatprep.subr.mxu0 0.0
    %370 = vmatpush1.msra.mxu0 0.0
    %371 = vmatprep.subr.mxu0 0.0
    %372 = vmatpush1.msra.mxu0 0.0
    %373 = vmatprep.subr.mxu0 0.0
    %374 = vmatpush1.msra.mxu0 0.0
    %375 = vmatprep.subr.mxu0 0.0
    %376 = vmatpush1.msra.mxu0 0.0
    %377 = vmatprep.mubr.f32.mxu0 0.0
    %378 = vmatmul.mubr.f32.gmra.mrb[0].mxu0 %v308
    %v379 = vpop.f32.mrb[0].mxu0
    %v380 = vadd.f32 %v304, %v379
    %v381 = vpop.f32.mrb[0].mxu0
    %382 = vmatprep.mubr.f32.mxu0 0.0
    %383 = vmatmul.mubr.f32.gmra.mrb[0].mxu0 %v311
    %v384 = vpop.f32.mrb[0].mxu0
    %v385 = vadd.f32 %v304, %v384
    %v386 = vpop.f32.mrb[0].mxu0
    %387 = vdwg.mxu0
    %v388 = vxor.u32 %v380, 2147483648
    %v389 = vxor.u32 %v385, 2147483648
    %v390 = vmul.f32 %v388, 1.442695
    %v391 = vpow.pop %v390
    %v392 = vmul.f32 %v389, 1.442695
    %v393 = vpow.pop %v392
    %v394 = vadd.f32 %v391, 1.0
    %v395 = vadd.f32 %v393, 1.0
    %v396 = vrcp.pop %v394
    %v397 = vmul.f32 1.0, %v396
    %v398 = vrcp.pop %v395
    %v399 = vmul.f32 1.0, %v398
    %401 = vset.pattern.permute.xlu0 0
    %402 = vperm.xlu0 %401, %v397
    %v403 = vpop.permute.xlu0 %402
    %406 = vset.pattern.permute.xlu0 0
    %407 = vperm.xlu0 %406, %v399
    %v408 = vpop.permute.xlu0 %407
    %v410 = vmul.f32 %v403, %v149
    %v411 = vmul.f32 %v408, %v154
    %v412 = vmul.f32 %v397, 0.35355338
    %v413 = vmul.f32 %v399, 0.35355338
    %415 = vset.pattern.permute.xlu0 1
    %416 = vperm.xlu0 %415, %v412
    %v417 = vpop.permute.xlu0 %416
    %420 = vset.pattern.permute.xlu0 1
    %421 = vperm.xlu0 %420, %v413
    %v422 = vpop.permute.xlu0 %421
    %v424 = vmul.f32 %v417, %v159
    %v425 = vmul.f32 %v422, %v164
    %v426 = vld [vmem:[%s3] sm:$0xff]
    %v427 = vld [vmem:[%s3 + $0x8] sm:$0xff]
    %v428 = vld [vmem:[%s3 + $0x10] sm:$0xff]
    %v429 = vld [vmem:[%s3 + $0x18] sm:$0xff]
    %v430 = vld [vmem:[%s3 + $0x20] sm:$0xff]
    %v431 = vld [vmem:[%s3 + $0x28] sm:$0xff]
    %v432 = vld [vmem:[%s3 + $0x30] sm:$0xff]
    %v433 = vld [vmem:[%s3 + $0x38] sm:$0xff]
    %442 = vrot.lane.b32.xlu0 %v426, 64
    %v443 = vpop.permute.xlu0 %442
    %444 = vrot.lane.b32.xlu0 %v427, 64
    %v445 = vpop.permute.xlu0 %444
    %446 = vrot.lane.b32.xlu0 %v428, 64
    %v447 = vpop.permute.xlu0 %446
    %448 = vrot.lane.b32.xlu0 %v429, 64
    %v449 = vpop.permute.xlu0 %448
    %450 = vrot.lane.b32.xlu0 %v430, 64
    %v451 = vpop.permute.xlu0 %450
    %452 = vrot.lane.b32.xlu0 %v431, 64
    %v453 = vpop.permute.xlu0 %452
    %454 = vrot.lane.b32.xlu0 %v432, 64
    %v455 = vpop.permute.xlu0 %454
    %456 = vrot.lane.b32.xlu0 %v433, 64
    %v457 = vpop.permute.xlu0 %456
    %v466 = vmul.f32 %v424, %v443
    %v467 = vmul.f32 %v425, %v445
    %v468 = vmul.f32 %v424, %v447
    %v469 = vmul.f32 %v425, %v449
    %v470 = vmul.f32 %v424, %v451
    %v471 = vmul.f32 %v425, %v453
    %v472 = vmul.f32 %v424, %v455
    %v473 = vmul.f32 %v425, %v457
    %v474 = vmul.f32 %v139, %v426
    %v475 = vmul.f32 %v144, %v427
    %v476 = vmul.f32 %v139, %v428
    %v477 = vmul.f32 %v144, %v429
    %v478 = vmul.f32 %v139, %v430
    %v479 = vmul.f32 %v144, %v431
    %v480 = vmul.f32 %v139, %v432
    %v481 = vmul.f32 %v144, %v433
    %490 = vrot.lane.b32.xlu0 %v466, 64
    %v491 = vpop.permute.xlu0 %490
    %492 = vrot.lane.b32.xlu0 %v467, 64
    %v493 = vpop.permute.xlu0 %492
    %494 = vrot.lane.b32.xlu0 %v468, 64
    %v495 = vpop.permute.xlu0 %494
    %496 = vrot.lane.b32.xlu0 %v469, 64
    %v497 = vpop.permute.xlu0 %496
    %498 = vrot.lane.b32.xlu0 %v470, 64
    %v499 = vpop.permute.xlu0 %498
    %500 = vrot.lane.b32.xlu0 %v471, 64
    %v501 = vpop.permute.xlu0 %500
    %502 = vrot.lane.b32.xlu0 %v472, 64
    %v503 = vpop.permute.xlu0 %502
    %504 = vrot.lane.b32.xlu0 %v473, 64
    %v505 = vpop.permute.xlu0 %504
    %508 = vrot.lane.b32.xlu0 %v410, 96
    %v509 = vpop.permute.xlu0 %508
    %510 = vrot.lane.b32.xlu0 %v411, 96
    %v511 = vpop.permute.xlu0 %510
    %v512 = vsel %vm53, %v491, 0
    %v514 = vsel %vm53, %v493, 0
    %v516 = vsel %vm53, %v495, 0
    %v518 = vsel %vm53, %v497, 0
    %v520 = vsel %vm53, %v499, 0
    %v522 = vsel %vm53, %v501, 0
    %v524 = vsel %vm53, %v503, 0
    %v526 = vsel %vm53, %v505, 0
    %v528 = vsel %vm53, %v509, 0
    %v530 = vsel %vm53, %v511, 0
    %532 = vmatprep.subr.mxu0 0.0
    %533 = vmatpush1.xpose.msra.mxu0 %v528
    %534 = vmatprep.subr.mxu0 0.0
    %535 = vmatpush1.xpose.msra.mxu0 %v530
    %536 = vmatprep.subr.mxu0 0.0
    %537 = vmatpush1.xpose.msra.mxu0 %v528
    %538 = vmatprep.subr.mxu0 0.0
    %539 = vmatpush1.xpose.msra.mxu0 %v530
    %540 = vmatprep.subr.mxu0 0.0
    %541 = vmatpush1.xpose.msra.mxu0 %v528
    %542 = vmatprep.subr.mxu0 0.0
    %543 = vmatpush1.xpose.msra.mxu0 %v530
    %544 = vmatprep.subr.mxu0 0.0
    %545 = vmatpush1.xpose.msra.mxu0 %v528
    %546 = vmatprep.subr.mxu0 0.0
    %547 = vmatpush1.xpose.msra.mxu0 %v530
    %548 = vmatprep.subr.mxu0 0.0
    %549 = vmatpush1.xpose.msra.mxu0 0.0
    %550 = vmatprep.subr.mxu0 0.0
    %551 = vmatpush1.xpose.msra.mxu0 0.0
    %552 = vmatprep.subr.mxu0 0.0
    %553 = vmatpush1.xpose.msra.mxu0 0.0
    %554 = vmatprep.subr.mxu0 0.0
    %555 = vmatpush1.xpose.msra.mxu0 0.0
    %556 = vmatprep.subr.mxu0 0.0
    %557 = vmatpush1.xpose.msra.mxu0 0.0
    %558 = vmatprep.subr.mxu0 0.0
    %559 = vmatpush1.xpose.msra.mxu0 0.0
    %560 = vmatprep.subr.mxu0 0.0
    %561 = vmatpush1.xpose.msra.mxu0 0.0
    %562 = vmatprep.subr.mxu0 0.0
    %563 = vmatpush1.xpose.msra.mxu0 0.0
    %564 = vmatprep.subr.mxu0 0.0
    %565 = vmatpush1.xpose.msra.mxu0 0.0
    %566 = vmatprep.subr.mxu0 0.0
    %567 = vmatpush1.xpose.msra.mxu0 0.0
    %568 = vmatprep.subr.mxu0 0.0
    %569 = vmatpush1.xpose.msra.mxu0 0.0
    %570 = vmatprep.subr.mxu0 0.0
    %571 = vmatpush1.xpose.msra.mxu0 0.0
    %572 = vmatprep.subr.mxu0 0.0
    %573 = vmatpush1.xpose.msra.mxu0 0.0
    %574 = vmatprep.subr.mxu0 0.0
    %575 = vmatpush1.xpose.msra.mxu0 0.0
    %576 = vmatprep.subr.mxu0 0.0
    %577 = vmatpush1.xpose.msra.mxu0 0.0
    %578 = vmatprep.subr.mxu0 0.0
    %579 = vmatpush1.xpose.msra.mxu0 0.0
    %580 = vmatprep.subr.mxu0 0.0
    %581 = vmatpush1.xpose.msra.mxu0 0.0
    %582 = vmatprep.subr.mxu0 0.0
    %583 = vmatpush1.xpose.msra.mxu0 0.0
    %584 = vmatprep.subr.mxu0 0.0
    %585 = vmatpush1.xpose.msra.mxu0 0.0
    %586 = vmatprep.subr.mxu0 0.0
    %587 = vmatpush1.xpose.msra.mxu0 0.0
    %588 = vmatprep.subr.mxu0 0.0
    %589 = vmatpush1.xpose.msra.mxu0 0.0
    %590 = vmatprep.subr.mxu0 0.0
    %591 = vmatpush1.xpose.msra.mxu0 0.0
    %592 = vmatprep.subr.mxu0 0.0
    %593 = vmatpush1.xpose.msra.mxu0 0.0
    %594 = vmatprep.subr.mxu0 0.0
    %595 = vmatpush1.xpose.msra.mxu0 0.0
    %596 = vmatprep.mubr.f32.mxu0 0.0
    %597 = vmatmul.mubr.f32.gmra.mrb[0].mxu0 %v512
    %v598 = vpop.f32.mrb[0].mxu0
    %v599 = vadd.f32 0.0, %v598
    %v600 = vpop.f32.mrb[0].mxu0
    %601 = vmatprep.mubr.f32.mxu0 0.0
    %602 = vmatmul.mubr.f32.gmra.mrb[0].mxu0 %v514
    %v603 = vpop.f32.mrb[0].mxu0
    %v604 = vadd.f32 0.0, %v603
    %v605 = vpop.f32.mrb[0].mxu0
    %606 = vmatprep.mubr.f32.mxu0 0.0
    %607 = vmatmul.mubr.f32.gmra.mrb[0].mxu0 %v516
    %v608 = vpop.f32.mrb[0].mxu0
    %v609 = vadd.f32 0.0, %v608
    %v610 = vpop.f32.mrb[0].mxu0
    %611 = vmatprep.mubr.f32.mxu0 0.0
    %612 = vmatmul.mubr.f32.gmra.mrb[0].mxu0 %v518
    %v613 = vpop.f32.mrb[0].mxu0
    %v614 = vadd.f32 0.0, %v613
    %v615 = vpop.f32.mrb[0].mxu0
    %616 = vmatprep.mubr.f32.mxu0 0.0
    %617 = vmatmul.mubr.f32.gmra.mrb[0].mxu0 %v520
    %v618 = vpop.f32.mrb[0].mxu0
    %v619 = vadd.f32 0.0, %v618
    %v620 = vpop.f32.mrb[0].mxu0
    %621 = vmatprep.mubr.f32.mxu0 0.0
    %622 = vmatmul.mubr.f32.gmra.mrb[0].mxu0 %v522
    %v623 = vpop.f32.mrb[0].mxu0
    %v624 = vadd.f32 0.0, %v623
    %v625 = vpop.f32.mrb[0].mxu0
    %626 = vmatprep.mubr.f32.mxu0 0.0
    %627 = vmatmul.mubr.f32.gmra.mrb[0].mxu0 %v524
    %v628 = vpop.f32.mrb[0].mxu0
    %v629 = vadd.f32 0.0, %v628
    %v630 = vpop.f32.mrb[0].mxu0
    %631 = vmatprep.mubr.f32.mxu0 0.0
    %632 = vmatmul.mubr.f32.gmra.mrb[0].mxu0 %v526
    %v633 = vpop.f32.mrb[0].mxu0
    %v634 = vadd.f32 0.0, %v633
    %v635 = vpop.f32.mrb[0].mxu0
    %636 = vdwg.mxu0
    %v637 = vld [vmem:[%s1] sm:$0x1]
    %vm638 = vcmp.gt.f32.partialorder %v637, 0.0
    %v639 = vsel %vm638, 1, 0
    %v640 = vlaneseq
    %v641 = vshrl.u32 %v640, 7
    %v642 = vsub.s32 0, %v641
    %v643 = vrot.slane %v639, %v642
    %vm644 = vcmp.eq.s32.totalorder %v643, 1
    %v645 = vsel %vm644, -1e+09, %v599
    %v646 = vsel %vm644, -1e+09, %v604
    %v647 = vsel %vm644, -1e+09, %v609
    %v648 = vsel %vm644, -1e+09, %v614
    %v649 = vsel %vm644, -1e+09, %v619
    %v650 = vsel %vm644, -1e+09, %v624
    %v651 = vsel %vm644, -1e+09, %v629
    %v652 = vsel %vm644, -1e+09, %v634
    %v653 = vld [vmem:[%s2] sm:$0xff]
    %v654 = vld [vmem:[%s2 + $0x8] sm:$0xff]
    %v655 = vld [vmem:[%s2 + $0x10] sm:$0xff]
    %v656 = vld [vmem:[%s2 + $0x18] sm:$0xff]
    %v657 = vld [vmem:[%s2 + $0x20] sm:$0xff]
    %v658 = vld [vmem:[%s2 + $0x28] sm:$0xff]
    %v659 = vld [vmem:[%s2 + $0x30] sm:$0xff]
    %v660 = vld [vmem:[%s2 + $0x38] sm:$0xff]
    %v661 = vadd.f32 %v645, %v653
    %v662 = vadd.f32 %v646, %v654
    %v663 = vadd.f32 %v647, %v655
    %v664 = vadd.f32 %v648, %v656
    %v665 = vadd.f32 %v649, %v657
    %v666 = vadd.f32 %v650, %v658
    %v667 = vadd.f32 %v651, %v659
    %v668 = vadd.f32 %v652, %v660
    %vm669 = vcmask 523264
    %v670 = vsel %vm669, %v661, -inf
    %671 = vmax.xlane.f32.xlu0 %v670
    %v672 = vpop.xlane.xlu0 %671
    %v673 = vsel %vm669, %v662, -inf
    %674 = vmax.xlane.f32.xlu0 %v673
    %v675 = vpop.xlane.xlu0 %674
    %v676 = vsel %vm669, %v663, -inf
    %677 = vmax.xlane.f32.xlu0 %v676
    %v678 = vpop.xlane.xlu0 %677
    %v679 = vsel %vm669, %v664, -inf
    %680 = vmax.xlane.f32.xlu0 %v679
    %v681 = vpop.xlane.xlu0 %680
    %v682 = vsel %vm669, %v665, -inf
    %683 = vmax.xlane.f32.xlu0 %v682
    %v684 = vpop.xlane.xlu0 %683
    %v685 = vsel %vm669, %v666, -inf
    %686 = vmax.xlane.f32.xlu0 %v685
    %v687 = vpop.xlane.xlu0 %686
    %v688 = vsel %vm669, %v667, -inf
    %689 = vmax.xlane.f32.xlu0 %v688
    %v690 = vpop.xlane.xlu0 %689
    %v691 = vsel %vm669, %v668, -inf
    %692 = vmax.xlane.f32.xlu0 %v691
    %v693 = vpop.xlane.xlu0 %692
    %v694 = vsub.f32 %v661, %v672
    %v695 = vsub.f32 %v662, %v675
    %v696 = vsub.f32 %v663, %v678
    %v697 = vsub.f32 %v664, %v681
    %v698 = vsub.f32 %v665, %v684
    %v699 = vsub.f32 %v666, %v687
    %v700 = vsub.f32 %v667, %v690
    %v701 = vsub.f32 %v668, %v693
    %v702 = vmul.f32 %v694, 1.442695
    %v703 = vpow.pop %v702
    %v704 = vmul.f32 %v695, 1.442695
    %v705 = vpow.pop %v704
    %v706 = vmul.f32 %v696, 1.442695
    %v707 = vpow.pop %v706
    %v708 = vmul.f32 %v697, 1.442695
    %v709 = vpow.pop %v708
    %v710 = vmul.f32 %v698, 1.442695
    %v711 = vpow.pop %v710
    %v712 = vmul.f32 %v699, 1.442695
    %v713 = vpow.pop %v712
    %v714 = vmul.f32 %v700, 1.442695
    %v715 = vpow.pop %v714
    %v716 = vmul.f32 %v701, 1.442695
    %v717 = vpow.pop %v716
    %v718 = vsel %vm669, %v703, 0.0
    %719 = vadd.xlane.f32.xlu0 %v718
    %v720 = vpop.xlane.xlu0 %719
    %v721 = vsel %vm669, %v705, 0.0
    %722 = vadd.xlane.f32.xlu0 %v721
    %v723 = vpop.xlane.xlu0 %722
    %v724 = vsel %vm669, %v707, 0.0
    %725 = vadd.xlane.f32.xlu0 %v724
    %v726 = vpop.xlane.xlu0 %725
    %v727 = vsel %vm669, %v709, 0.0
    %728 = vadd.xlane.f32.xlu0 %v727
    %v729 = vpop.xlane.xlu0 %728
    %v730 = vsel %vm669, %v711, 0.0
    %731 = vadd.xlane.f32.xlu0 %v730
    %v732 = vpop.xlane.xlu0 %731
    %v733 = vsel %vm669, %v713, 0.0
    %734 = vadd.xlane.f32.xlu0 %v733
    %v735 = vpop.xlane.xlu0 %734
    %v736 = vsel %vm669, %v715, 0.0
    %737 = vadd.xlane.f32.xlu0 %v736
    %v738 = vpop.xlane.xlu0 %737
    %v739 = vsel %vm669, %v717, 0.0
    %740 = vadd.xlane.f32.xlu0 %v739
    %v741 = vpop.xlane.xlu0 %740
    %v742 = vrcp.pop %v720
    %v743 = vmul.f32 %v703, %v742
    %v744 = vrcp.pop %v723
    %v745 = vmul.f32 %v705, %v744
    %v746 = vrcp.pop %v726
    %v747 = vmul.f32 %v707, %v746
    %v748 = vrcp.pop %v729
    %v749 = vmul.f32 %v709, %v748
    %v750 = vrcp.pop %v732
    %v751 = vmul.f32 %v711, %v750
    %v752 = vrcp.pop %v735
    %v753 = vmul.f32 %v713, %v752
    %v754 = vrcp.pop %v738
    %v755 = vmul.f32 %v715, %v754
    %v756 = vrcp.pop %v741
    %v757 = vmul.f32 %v717, %v756
    %v759 = vsel %vm669, %v743, 0
    %v762 = vsel %vm669, %v745, 0
    %v765 = vsel %vm669, %v747, 0
    %v768 = vsel %vm669, %v749, 0
    %v771 = vsel %vm669, %v751, 0
    %v774 = vsel %vm669, %v753, 0
    %v777 = vsel %vm669, %v755, 0
    %v780 = vsel %vm669, %v757, 0
    %782 = vmatprep.subr.mxu0 0.0
    %783 = vmatpush1.msra.mxu0 %v474
    %784 = vmatprep.subr.mxu0 0.0
    %785 = vmatpush1.msra.mxu0 %v475
    %786 = vmatprep.subr.mxu0 0.0
    %787 = vmatpush1.msra.mxu0 %v476
    %788 = vmatprep.subr.mxu0 0.0
    %789 = vmatpush1.msra.mxu0 %v477
    %790 = vmatprep.subr.mxu0 0.0
    %791 = vmatpush1.msra.mxu0 %v478
    %792 = vmatprep.subr.mxu0 0.0
    %793 = vmatpush1.msra.mxu0 %v479
    %794 = vmatprep.subr.mxu0 0.0
    %795 = vmatpush1.msra.mxu0 %v480
    %796 = vmatprep.subr.mxu0 0.0
    %797 = vmatpush1.msra.mxu0 %v481
    %798 = vmatprep.subr.mxu0 0.0
    %799 = vmatpush1.msra.mxu0 0.0
    %800 = vmatprep.subr.mxu0 0.0
    %801 = vmatpush1.msra.mxu0 0.0
    %802 = vmatprep.subr.mxu0 0.0
    %803 = vmatpush1.msra.mxu0 0.0
    %804 = vmatprep.subr.mxu0 0.0
    %805 = vmatpush1.msra.mxu0 0.0
    %806 = vmatprep.subr.mxu0 0.0
    %807 = vmatpush1.msra.mxu0 0.0
    %808 = vmatprep.subr.mxu0 0.0
    %809 = vmatpush1.msra.mxu0 0.0
    %810 = vmatprep.subr.mxu0 0.0
    %811 = vmatpush1.msra.mxu0 0.0
    %812 = vmatprep.subr.mxu0 0.0
    %813 = vmatpush1.msra.mxu0 0.0
    %814 = vmatprep.subr.mxu0 0.0
    %815 = vmatpush1.msra.mxu0 0.0
    %816 = vmatprep.subr.mxu0 0.0
    %817 = vmatpush1.msra.mxu0 0.0
    %818 = vmatprep.subr.mxu0 0.0
    %819 = vmatpush1.msra.mxu0 0.0
    %820 = vmatprep.subr.mxu0 0.0
    %821 = vmatpush1.msra.mxu0 0.0
    %822 = vmatprep.subr.mxu0 0.0
    %823 = vmatpush1.msra.mxu0 0.0
    %824 = vmatprep.subr.mxu0 0.0
    %825 = vmatpush1.msra.mxu0 0.0
    %826 = vmatprep.subr.mxu0 0.0
    %827 = vmatpush1.msra.mxu0 0.0
    %828 = vmatprep.subr.mxu0 0.0
    %829 = vmatpush1.msra.mxu0 0.0
    %830 = vmatprep.subr.mxu0 0.0
    %831 = vmatpush1.msra.mxu0 0.0
    %832 = vmatprep.subr.mxu0 0.0
    %833 = vmatpush1.msra.mxu0 0.0
    %834 = vmatprep.subr.mxu0 0.0
    %835 = vmatpush1.msra.mxu0 0.0
    %836 = vmatprep.subr.mxu0 0.0
    %837 = vmatpush1.msra.mxu0 0.0
    %838 = vmatprep.subr.mxu0 0.0
    %839 = vmatpush1.msra.mxu0 0.0
    %840 = vmatprep.subr.mxu0 0.0
    %841 = vmatpush1.msra.mxu0 0.0
    %842 = vmatprep.subr.mxu0 0.0
    %843 = vmatpush1.msra.mxu0 0.0
    %844 = vmatprep.subr.mxu0 0.0
    %845 = vmatpush1.msra.mxu0 0.0
    %846 = vmatprep.mubr.f32.mxu0 0.0
    %847 = vmatmul.mubr.f32.gmra.mrb[0].mxu0 %v759
    %v848 = vpop.f32.mrb[0].mxu0
    %v849 = vadd.f32 0.0, %v848
    %v850 = vpop.f32.mrb[0].mxu0
    %851 = vmatprep.mubr.f32.mxu0 0.0
    %852 = vmatmul.mubr.f32.gmra.mrb[0].mxu0 %v762
    %v853 = vpop.f32.mrb[0].mxu0
    %v854 = vadd.f32 0.0, %v853
    %v855 = vpop.f32.mrb[0].mxu0
    %856 = vmatprep.mubr.f32.mxu0 0.0
    %857 = vmatmul.mubr.f32.gmra.mrb[0].mxu0 %v765
    %v858 = vpop.f32.mrb[0].mxu0
    %v859 = vadd.f32 0.0, %v858
    %v860 = vpop.f32.mrb[0].mxu0
    %861 = vmatprep.mubr.f32.mxu0 0.0
    %862 = vmatmul.mubr.f32.gmra.mrb[0].mxu0 %v768
    %v863 = vpop.f32.mrb[0].mxu0
    %v864 = vadd.f32 0.0, %v863
    %v865 = vpop.f32.mrb[0].mxu0
    %866 = vmatprep.mubr.f32.mxu0 0.0
    %867 = vmatmul.mubr.f32.gmra.mrb[0].mxu0 %v771
    %v868 = vpop.f32.mrb[0].mxu0
    %v869 = vadd.f32 0.0, %v868
    %v870 = vpop.f32.mrb[0].mxu0
    %871 = vmatprep.mubr.f32.mxu0 0.0
    %872 = vmatmul.mubr.f32.gmra.mrb[0].mxu0 %v774
    %v873 = vpop.f32.mrb[0].mxu0
    %v874 = vadd.f32 0.0, %v873
    %v875 = vpop.f32.mrb[0].mxu0
    %876 = vmatprep.mubr.f32.mxu0 0.0
    %877 = vmatmul.mubr.f32.gmra.mrb[0].mxu0 %v777
    %v878 = vpop.f32.mrb[0].mxu0
    %v879 = vadd.f32 0.0, %v878
    %v880 = vpop.f32.mrb[0].mxu0
    %881 = vmatprep.mubr.f32.mxu0 0.0
    %882 = vmatmul.mubr.f32.gmra.mrb[0].mxu0 %v780
    %v883 = vpop.f32.mrb[0].mxu0
    %v884 = vadd.f32 0.0, %v883
    %v885 = vpop.f32.mrb[0].mxu0
    %886 = vdwg.mxu0
    %v887 = vadd.f32 %v849, %v859
    %v888 = vadd.f32 %v854, %v864
    %v889 = vadd.f32 %v887, %v869
    %v890 = vadd.f32 %v888, %v874
    %v891 = vadd.f32 %v889, %v879
    %v892 = vadd.f32 %v890, %v884
    %v894 = vrot.slane %v891, 4
    %895 = vrot.lane.b32.xlu0 %v894, 32
    %v896 = vpop.permute.xlu0 %895
    %899 = vrot.lane.b32.xlu0 %v892, 64
    %v900 = vpop.permute.xlu0 %899
    %v902 = vrot.slane %v892, 4
    %903 = vrot.lane.b32.xlu0 %v902, 96
    %v904 = vpop.permute.xlu0 %903
    %v906 = vsel %vm53, %v891, %v896
    %v907 = vsel %vm669, %v906, %v900
    %vm908 = vcmask 785408
    %v909 = vsel %vm908, %v907, %v904
    %910 = vst [vmem:[#allocation2] sm:$0xf] %v909
    // Predicated region
    $region42: #{tpu_custom_call.1} parent=1 // pred_check
      _
    $region43: #{tpu_custom_call.1} parent=1 // pred_check_branch
      %912 = sbr.rel (0) target = $region45
    $region44: #{tpu_custom_call.1} parent=1 // pred_region
      %s914 = ssub.s32 64, 64
      %915 = vsyncadd [#allocation3], %s914
      %s917 = sshll.u32 [#allocation2], 4
      %s918 = int_to_ptr.vmem [resolvable:$true] %s917
      %920 = dma.vmem_to_hbm [thread:$0]  %s918, 64, %s10, [#allocation3]
    $region45: #{tpu_custom_call.1} parent=1 // pred_fallthru
      _
    // Predicated region
    $region46: #{tpu_custom_call.1} parent=1 // pred_check
      _
    $region47: #{tpu_custom_call.1} parent=1 // pred_check_branch
      %922 = sbr.rel (0) target = $region49
    $region48: #{tpu_custom_call.1} parent=1 // pred_region
      %923 = dma.done [#allocation3], 64
    $region49: #{tpu_custom_call.1} parent=1 // pred_fallthru
      _
    %924 = vsyncpa [#allocation3], 1

</llo_original>
